<compile_context>
chip_gen: v5e
topology: v5e:2x2
jax: 0.10.0
libtpu: 0.0.40
codegen_flags: <defaults>
</compile_context>

<pallas_src>
import functools

import jax
import jax.numpy as jnp
from jax import lax
from jax.experimental import pallas as pl
from jax.experimental.pallas import tpu as pltpu


# ---------------------------------------------------------------------------
# Pallas kernel: one M-tile of
#   out = relu( relu(X @ W1s + shift1) @ W2s + shift2 )
# W1s/W2s already carry the folded BatchNorm scale (and W2s the channel-shuffle
# row permutation); shift1/shift2 carry the folded conv bias + BN shift.
# ---------------------------------------------------------------------------
def _fused_breakdown_kernel(x_ref, w1_ref, s1_ref, w2_ref, s2_ref, o_ref):
    h = jnp.dot(x_ref[...], w1_ref[...], preferred_element_type=jnp.float32)
    h = jnp.maximum(h + s1_ref[...], 0.0)
    y = jnp.dot(h.astype(jnp.bfloat16), w2_ref[...],
                preferred_element_type=jnp.float32)
    y = jnp.maximum(y + s2_ref[...], 0.0)
    o_ref[...] = y.astype(o_ref.dtype)


def _round_up(x, m):
    return ((x + m - 1) // m) * m


def _pick_tm(m, tm_max=512):
    """M-tile: large (amortizes ~0.35us/step), multiple of 16 (bf16 sublane
    packing), and >= 2 grid steps when M allows (v7x has 2 TensorCores)."""
    m8 = _round_up(m, 8)
    if 32 < m8 <= 2 * tm_max:
        tm = _round_up(-(-m // 2), 16)
    else:
        tm = tm_max
    return max(8, min(tm, m8))


def fused_breakdown_gemm(patches, w1, shift1, w2, shift2, *, tm=None):
    """patches: (M, K1) bf16; w1: (K1, C1p) bf16; shift1: (1, C1p) f32;
    w2: (C1p, C2p) bf16; shift2: (1, C2p) f32  ->  (M, C2p) f32."""
    M, K1 = patches.shape
    C1p = w1.shape[1]
    C2p = w2.shape[1]
    if tm is None:
        tm = _pick_tm(M)
    grid = (pl.cdiv(M, tm),)  # ragged tail: Pallas masks the OOB writes

    return pl.pallas_call(
        _fused_breakdown_kernel,
        out_shape=jax.ShapeDtypeStruct((M, C2p), jnp.float32),
        grid_spec=pltpu.PrefetchScalarGridSpec(
            num_scalar_prefetch=0,
            grid=grid,
            in_specs=[
                pl.BlockSpec((tm, K1), lambda i: (i, 0)),     # activations
                pl.BlockSpec((K1, C1p), lambda i: (0, 0)),    # W1 (resident)
                pl.BlockSpec((1, C1p), lambda i: (0, 0)),     # shift1
                pl.BlockSpec((C1p, C2p), lambda i: (0, 0)),   # W2 (resident)
                pl.BlockSpec((1, C2p), lambda i: (0, 0)),     # shift2
            ],
            out_specs=pl.BlockSpec((tm, C2p), lambda i: (i, 0)),
        ),
        compiler_params=pltpu.CompilerParams(
            dimension_semantics=("parallel",),
        ),
    )(patches, w1, shift1, w2, shift2)


# ---------------------------------------------------------------------------
# Plain-JAX glue (trace-time on tiny arrays, or fused by XLA)
# ---------------------------------------------------------------------------
def im2col(x_nchw, k, stride=1, dilation=1, padding=0):
    """Return patches (N*Ho*Wo, C*k*k) ordered as ci*k*k + kh*k + kw."""
    n, c, h, w = x_nchw.shape
    if padding:
        x_nchw = jnp.pad(
            x_nchw, ((0, 0), (0, 0), (padding, padding), (padding, padding)))
    hp, wp = x_nchw.shape[2], x_nchw.shape[3]
    ho = (hp - dilation * (k - 1) - 1) // stride + 1
    wo = (wp - dilation * (k - 1) - 1) // stride + 1
    cols = []
    for kh in range(k):
        for kw in range(k):
            sl = x_nchw[
                :, :,
                kh * dilation: kh * dilation + (ho - 1) * stride + 1: stride,
                kw * dilation: kw * dilation + (wo - 1) * stride + 1: stride,
            ]
            cols.append(sl)                       # (N, C, Ho, Wo)
    p = jnp.stack(cols, axis=2)                   # (N, C, k*k, Ho, Wo)
    p = p.reshape(n, c * k * k, ho, wo)
    p = p.transpose(0, 2, 3, 1).reshape(n * ho * wo, c * k * k)
    return p, ho, wo


def grouped_weight_to_dense(w, in_channels, groups):
    """w: (Cout, Cin//groups, kh, kw) -> block-diagonal dense (Cin*kh*kw, Cout)."""
    cout, cin_g, kh, kw = w.shape
    cout_g = cout // groups
    dense = jnp.zeros((in_channels * kh * kw, cout), w.dtype)
    for g in range(groups):
        wg = w[g * cout_g:(g + 1) * cout_g]       # (Cout_g, Cin_g, kh, kw)
        wg = wg.transpose(1, 2, 3, 0).reshape(cin_g * kh * kw, cout_g)
        dense = dense.at[
            g * cin_g * kh * kw:(g + 1) * cin_g * kh * kw,
            g * cout_g:(g + 1) * cout_g,
        ].set(wg)
    return dense


def fold_bias_bn(bias, gamma, beta, mean, var, eps=1e-5):
    scale = gamma / jnp.sqrt(var + eps)
    shift = (bias - mean) * scale + beta
    return scale, shift


# ---------------------------------------------------------------------------
# BreakdownConv2dBlock forward
# ---------------------------------------------------------------------------
def breakdown_conv2d_block(x_nchw, params, *, kernel_size, groups,
                           stride=1, padding=0, dilation=1, eps=1e-5):
    n, cin, h, w = x_nchw.shape
    k = kernel_size
    w1, b1, w2, b2 = params["w1"], params["b1"], params["w2"], params["b2"]
    c1 = w1.shape[0]            # out_channels * k * groups
    cout = w2.shape[0]          # out_channels

    # --- FixedOffsetMask4d: out channel c keeps only kernel row (c % k) ------
    row_idx = jnp.arange(c1) % k
    mask = (jnp.arange(k)[None, :] == row_idx[:, None]).astype(w1.dtype)
    w1_masked = w1 * mask[:, None, :, None]

    # --- grouped convs as block-diagonal dense GEMM weights ------------------
    w1_dense = grouped_weight_to_dense(w1_masked, cin, groups)   # (cin*k*k, c1)
    w2_dense = grouped_weight_to_dense(w2, c1, cout)             # (c1, cout)

    # --- fold conv bias + eval-mode BatchNorm (mean=0,var=1,gamma=1,beta=0);
    #     then fold the per-channel scale into the weight columns ------------
    scale1, shift1 = fold_bias_bn(
        b1, jnp.ones((c1,)), jnp.zeros((c1,)), jnp.zeros((c1,)),
        jnp.ones((c1,)), eps)
    scale2, shift2 = fold_bias_bn(
        b2, jnp.ones((cout,)), jnp.zeros((cout,)), jnp.zeros((cout,)),
        jnp.ones((cout,)), eps)
    w1_s = w1_dense * scale1[None, :]
    w2_s = w2_dense * scale2[None, :]

    # --- channel shuffle folded into a row permutation of W2 -----------------
    # shuffled y1 = y1[:, perm]  ==>  y1[:, perm] @ W2 == y1 @ W2[argsort(perm)]
    cpg = c1 // groups
    perm = jnp.arange(c1).reshape(groups, cpg).T.reshape(-1)
    w2_sp = w2_s[jnp.argsort(perm), :]

    # --- lane-pad channel dims to multiples of 128 (zero cols/rows) ----------
    C1p = _round_up(c1, 128)
    C2p = _round_up(cout, 128)
    k1_rows = w1_dense.shape[0]
    w1_p = jnp.zeros((k1_rows, C1p), jnp.float32).at[:, :c1].set(w1_s)
    s1_p = jnp.zeros((1, C1p), jnp.float32).at[0, :c1].set(shift1)
    w2_p = jnp.zeros((C1p, C2p), jnp.float32).at[:c1, :cout].set(w2_sp)
    s2_p = jnp.zeros((1, C2p), jnp.float32).at[0, :cout].set(shift2)

    # --- im2col in bf16 (halves activation bytes feeding the kernel) ---------
    # NOTE: stride/padding/dilation applied to the k x k conv; the 1x1 pointwise
    # conv runs per output position (module defaults stride=1, padding=0).
    patches, ho, wo = im2col(x_nchw.astype(jnp.bfloat16), k,
                             stride=stride, dilation=dilation, padding=padding)

    # --- single fused Pallas kernel: conv1+BN+ReLU -> shuffle -> conv2+BN+ReLU
    y2p = fused_breakdown_gemm(
        patches, w1_p.astype(jnp.bfloat16), s1_p,
        w2_p.astype(jnp.bfloat16), s2_p)
    y2 = y2p[:, :cout]                                          # drop lane pad
    return y2.reshape(n, ho, wo, cout).transpose(0, 3, 1, 2)    # back to NCHW


# ---------------------------------------------------------------------------
# Pure-JAX f32 reference (lax convs) for correctness checking
# ---------------------------------------------------------------------------
def reference_forward(x, params, *, kernel_size, groups,
                      stride=1, padding=0, dilation=1, eps=1e-5):
    k = kernel_size
    w1, b1, w2, b2 = params["w1"], params["b1"], params["w2"], params["b2"]
    c1, cout = w1.shape[0], w2.shape[0]
    row_idx = jnp.arange(c1) % k
    mask = (jnp.arange(k)[None, :] == row_idx[:, None]).astype(w1.dtype)
    w1m = w1 * mask[:, None, :, None]
    bn = 1.0 / jnp.sqrt(1.0 + eps)        # PyTorch-default eval BatchNorm

    y = lax.conv_general_dilated(
        x, w1m, window_strides=(stride, stride),
        padding=[(padding, padding)] * 2, rhs_dilation=(dilation, dilation),
        dimension_numbers=("NCHW", "OIHW", "NCHW"), feature_group_count=groups)
    y = jnp.maximum((y + b1[None, :, None, None]) * bn, 0.0)

    n_, c_, h_, w_ = y.shape
    y = y.reshape(n_, groups, c_ // groups, h_, w_).transpose(0, 2, 1, 3, 4)
    y = y.reshape(n_, c_, h_, w_)

    y = lax.conv_general_dilated(
        y, w2, window_strides=(1, 1), padding=[(0, 0)] * 2,
        dimension_numbers=("NCHW", "OIHW", "NCHW"), feature_group_count=cout)
    y = jnp.maximum((y + b2[None, :, None, None]) * bn, 0.0)
    return y


def init_params(key, in_channels, out_channels, kernel_size, groups):
    k = kernel_size
    c1 = out_channels * k * groups
    k1, k2, k3, k4 = jax.random.split(key, 4)
    w1 = 0.1 * jax.random.normal(
        k1, (c1, in_channels // groups, k, k), jnp.float32)
    b1 = 0.1 * jax.random.normal(k2, (c1,), jnp.float32)
    w2 = 0.1 * jax.random.normal(
        k3, (out_channels, c1 // out_channels, 1, 1), jnp.float32)
    b2 = 0.1 * jax.random.normal(k4, (out_channels,), jnp.float32)
    return {"w1": w1, "b1": b1, "w2": w2, "b2": b2}


if __name__ == "__main__":
    # Small config: in_channels=4, out_channels=4, kernel=3, groups=2.
    # activation / pointwise_activation instances chosen as ReLU; BatchNorm
    # uses PyTorch-default eval statistics.
    in_channels, out_channels, kernel_size, groups = 4, 4, 3, 2
    key = jax.random.PRNGKey(0)
    kx, kp = jax.random.split(key)
    x = jax.random.normal(kx, (2, in_channels, 16, 16), jnp.float32)
    params = init_params(kp, in_channels, out_channels, kernel_size, groups)

    fwd = jax.jit(functools.partial(
        breakdown_conv2d_block, kernel_size=kernel_size, groups=groups))
    out = fwd(x, params)
    jax.block_until_ready(out)
    assert out.shape == (2, out_channels, 14, 14), out.shape
    assert bool(jnp.all(jnp.isfinite(out)))

    ref = reference_forward(x, params, kernel_size=kernel_size, groups=groups)
    max_err = float(jnp.max(jnp.abs(out - ref)))
    assert bool(jnp.allclose(out, ref, atol=2e-2, rtol=2e-2)), max_err
    print("KERNEL_OK")
</pallas_src>

<mosaic_0001>
module attributes {stable_mosaic.version = 11 : i64} {
  func.func @_fused_breakdown_kernel(%arg0: i32, %arg1: memref<208x36xbf16, #tpu.memory_space<vmem>>, %arg2: memref<36x128xbf16, #tpu.memory_space<vmem>>, %arg3: memref<1x128xf32, #tpu.memory_space<vmem>>, %arg4: memref<128x128xbf16, #tpu.memory_space<vmem>>, %arg5: memref<1x128xf32, #tpu.memory_space<vmem>>, %arg6: memref<208x128xf32, #tpu.memory_space<vmem>>) attributes {dimension_semantics = [#tpu.dimension_semantics<parallel>], iteration_bounds = array<i64: 2>, scalar_prefetch = 0 : i64, scratch_operands = 0 : i64, tpu.core_type = #tpu.core_type<tc>, window_params = [{transform_indices = @transform_0, window_bounds = array<i64: 208, 36>}, {pipeline_mode = #tpu.pipeline_mode<synchronous>, transform_indices = @transform_1, window_bounds = array<i64: 36, 128>}, {pipeline_mode = #tpu.pipeline_mode<synchronous>, transform_indices = @transform_2, window_bounds = array<i64: 1, 128>}, {pipeline_mode = #tpu.pipeline_mode<synchronous>, transform_indices = @transform_3, window_bounds = array<i64: 128, 128>}, {pipeline_mode = #tpu.pipeline_mode<synchronous>, transform_indices = @transform_4, window_bounds = array<i64: 1, 128>}, {transform_indices = @transform_5, window_bounds = array<i64: 208, 128>}]} {
    %c0 = arith.constant 0 : index
    %c0_0 = arith.constant 0 : index
    %0 = vector.load %arg1[%c0, %c0_0] : memref<208x36xbf16, #tpu.memory_space<vmem>>, vector<208x36xbf16>
    %c0_1 = arith.constant 0 : index
    %c0_2 = arith.constant 0 : index
    %1 = vector.load %arg2[%c0_1, %c0_2] : memref<36x128xbf16, #tpu.memory_space<vmem>>, vector<36x128xbf16>
    %cst = arith.constant dense<0.000000e+00> : vector<208x128xf32>
    %2 = tpu.matmul %0, %1, %cst {dimension_numbers = #tpu.dot_dimension_numbers<[1], [0], [0], [1], [0, 0, 1, 1], [], []>} : vector<208x36xbf16>, vector<36x128xbf16>, vector<208x128xf32> -> vector<208x128xf32>
    %c0_3 = arith.constant 0 : index
    %c0_4 = arith.constant 0 : index
    %3 = vector.load %arg3[%c0_3, %c0_4] : memref<1x128xf32, #tpu.memory_space<vmem>>, vector<1x128xf32>
    %4 = vector.broadcast %3 : vector<1x128xf32> to vector<208x128xf32>
    %5 = arith.addf %2, %4 : vector<208x128xf32>
    %cst_5 = arith.constant 0.000000e+00 : f32
    %6 = vector.broadcast %cst_5 : f32 to vector<208x128xf32>
    %7 = arith.maximumf %5, %6 : vector<208x128xf32>
    %8 = arith.truncf %7 : vector<208x128xf32> to vector<208x128xbf16>
    %c0_6 = arith.constant 0 : index
    %c0_7 = arith.constant 0 : index
    %9 = vector.load %arg4[%c0_6, %c0_7] : memref<128x128xbf16, #tpu.memory_space<vmem>>, vector<128x128xbf16>
    %cst_8 = arith.constant dense<0.000000e+00> : vector<208x128xf32>
    %10 = tpu.matmul %8, %9, %cst_8 {dimension_numbers = #tpu.dot_dimension_numbers<[1], [0], [0], [1], [0, 0, 1, 1], [], []>} : vector<208x128xbf16>, vector<128x128xbf16>, vector<208x128xf32> -> vector<208x128xf32>
    %c0_9 = arith.constant 0 : index
    %c0_10 = arith.constant 0 : index
    %11 = vector.load %arg5[%c0_9, %c0_10] : memref<1x128xf32, #tpu.memory_space<vmem>>, vector<1x128xf32>
    %12 = vector.broadcast %11 : vector<1x128xf32> to vector<208x128xf32>
    %13 = arith.addf %10, %12 : vector<208x128xf32>
    %cst_11 = arith.constant 0.000000e+00 : f32
    %14 = vector.broadcast %cst_11 : f32 to vector<208x128xf32>
    %15 = arith.maximumf %13, %14 : vector<208x128xf32>
    %c0_12 = arith.constant 0 : index
    %c0_13 = arith.constant 0 : index
    %16 = vector.load %arg6[%c0_12, %c0_13] : memref<208x128xf32, #tpu.memory_space<vmem>>, vector<208x128xf32>
    tpu.vector_store %arg6[%c0_12, %c0_13], %15 {strides = array<i32>} : memref<208x128xf32, #tpu.memory_space<vmem>>, vector<208x128xf32>,
    return
  }
  func.func @transform_0(%arg0: i32) -> (i32, i32) {
    %c0_i32 = arith.constant 0 : i32
    %c0_i32_0 = arith.constant 0 : i32
    return %arg0, %c0_i32 : i32, i32
  }
  func.func @transform_1(%arg0: i32) -> (i32, i32) {
    %c0_i32 = arith.constant 0 : i32
    %c0_i32_0 = arith.constant 0 : i32
    %c0_i32_1 = arith.constant 0 : i32
    return %c0_i32, %c0_i32_0 : i32, i32
  }
  func.func @transform_2(%arg0: i32) -> (i32, i32) {
    %c0_i32 = arith.constant 0 : i32
    %c0_i32_0 = arith.constant 0 : i32
    %c0_i32_1 = arith.constant 0 : i32
    return %c0_i32, %c0_i32_0 : i32, i32
  }
  func.func @transform_3(%arg0: i32) -> (i32, i32) {
    %c0_i32 = arith.constant 0 : i32
    %c0_i32_0 = arith.constant 0 : i32
    %c0_i32_1 = arith.constant 0 : i32
    return %c0_i32, %c0_i32_0 : i32, i32
  }
  func.func @transform_4(%arg0: i32) -> (i32, i32) {
    %c0_i32 = arith.constant 0 : i32
    %c0_i32_0 = arith.constant 0 : i32
    %c0_i32_1 = arith.constant 0 : i32
    return %c0_i32, %c0_i32_0 : i32, i32
  }
  func.func @transform_5(%arg0: i32) -> (i32, i32) {
    %c0_i32 = arith.constant 0 : i32
    %c0_i32_0 = arith.constant 0 : i32
    return %arg0, %c0_i32 : i32, i32
  }
}

</mosaic_0001>

<llo_original>
// kernel: breakdown_conv2d_block.1
$region0: #{breakdown_conv2d_block.1}
  #allocation0 [shape = 'u32[]', space=smem, size = 0x4, offset = 0x4, fixed_abs, tag = 'smem constant byte address 0x4 - core index']
  #allocation1 [shape = 'u32[72,128]{1,0:T(1,128)}', space=vmem, size = 0x9000, scoped, tag = 'internal scratch']
  %s0 = inlined_call_operand.vmem [shape: bf16[392,36], index: 0, kind: input, shape index: {}]
  %s1 = inlined_call_operand.vmem [shape: bf16[36,128], index: 1, kind: input, shape index: {}]
  %s2 = inlined_call_operand.vmem [shape: f32[1,128], index: 2, kind: input, shape index: {}]
  %s3 = inlined_call_operand.vmem [shape: bf16[128,128], index: 3, kind: input, shape index: {}]
  %s4 = inlined_call_operand.vmem [shape: f32[1,128], index: 4, kind: input, shape index: {}]
  %s5 = inlined_call_operand.vmem [shape: f32[392,128], index: 5, kind: output, shape index: {}]
  %s6 = sld [smem:[#allocation0]]
  $region101: #{breakdown_conv2d_block.1} parent=0
    _
  %s8 = ssub.s32 1, %s6
  %s9 = scalar_select 0, %s8, %s6
  $region1: #{breakdown_conv2d_block.1} parent=0
    #allocation2 [shape = 'u8[212992]{0}', space=vmem, size = 0x34000, scoped, tag = 'output window, operand 0']
    loop: start=0, step=1, limit=4
    $region2: #{breakdown_conv2d_block.1} parent=1 // loop_pre_header
      _
    $region3: #{breakdown_conv2d_block.1} parent=1 // loop_header
      %s11 = sphi 0, %s15
      %p12 = scmp.ge.s32.totalorder %s11, 4
      %s21 = sphi 0, %s23
      %s24 = sphi 0, %s21
      %s25 = sphi 0, %s24
      %s41 = sphi 0, %s25
      %s45 = sphi 0, %s45
      %s47 = sphi 0, %s45
      %s48 = sphi 0, %s47
      %s62 = sphi 0, %s48
      %s66 = sphi 0, %s66
      %s68 = sphi 0, %s66
      %s69 = sphi 0, %s68
      %s83 = sphi 0, %s69
      %s87 = sphi 0, %s87
      %s89 = sphi 0, %s87
      %s90 = sphi 0, %s89
      %s104 = sphi 0, %s90
      %s108 = sphi 0, %s108
      %s110 = sphi 0, %s108
      %s111 = sphi 0, %s110
      %s125 = sphi 0, %s111
      %s131 = sphi 0, %s133
      %s134 = sphi 0, %s131
      %s135 = sphi 0, %s134
      %s151 = sphi 0, %s135
    $region4: #{breakdown_conv2d_block.1} parent=1 // loop_header_branch
      %14 = sbr.rel (%p12) target = $region8
    $region5: #{breakdown_conv2d_block.1} parent=1 // loop_body
      %s16 = ssub.s32 %s11, 1
      %s17 = ssub.s32 %s11, 2
      %s18 = sadd.s32 %s11, 1
      %s19 = ssub.s32 %s11, %s18
      %p20 = scmp.eq.s32.totalorder %s19, 0
      %s22 = sadd.s32 %s21, 1
      %s23 = scalar_select %p20, %s21, %s22
      %p26 = pneg %p20
      %p27 = scmp.eq.s32.totalorder %s11, 1
      %p28 = por %p26, %p27
      %p29 = scmp.ne.s32.totalorder %s21, %s24
      %p30 = scmp.eq.s32.totalorder %s11, 0
      %p31 = por %p29, %p30
      %p32 = scmp.ne.s32.totalorder %s21, %s24
      %p33 = scmp.eq.s32.totalorder %s16, 1
      %p34 = por %p32, %p33
      %p35 = scmp.ne.s32.totalorder %s24, %s25
      %p36 = scmp.eq.s32.totalorder %s16, 0
      %p37 = por %p35, %p36
      %p38 = scmp.ne.s32.totalorder %s24, %s25
      %p39 = scmp.eq.s32.totalorder %s17, 1
      %p40 = por %p38, %p39
      %p42 = scmp.ne.s32.totalorder %s25, %s41
      %p43 = scmp.eq.s32.totalorder %s17, 0
      %p44 = por %p42, %p43
      %s46 = sadd.s32 %s45, 1
      %p49 = scmp.eq.s32.totalorder %s11, 1
      %p50 = scmp.ne.s32.totalorder %s45, %s47
      %p51 = scmp.eq.s32.totalorder %s11, 0
      %p52 = por %p50, %p51
      %p53 = scmp.ne.s32.totalorder %s45, %s47
      %p54 = scmp.eq.s32.totalorder %s16, 1
      %p55 = por %p53, %p54
      %p56 = scmp.ne.s32.totalorder %s47, %s48
      %p57 = scmp.eq.s32.totalorder %s16, 0
      %p58 = por %p56, %p57
      %p59 = scmp.ne.s32.totalorder %s47, %s48
      %p60 = scmp.eq.s32.totalorder %s17, 1
      %p61 = por %p59, %p60
      %p63 = scmp.ne.s32.totalorder %s48, %s62
      %p64 = scmp.eq.s32.totalorder %s17, 0
      %p65 = por %p63, %p64
      %s67 = sadd.s32 %s66, 1
      %p70 = scmp.eq.s32.totalorder %s11, 1
      %p71 = scmp.ne.s32.totalorder %s66, %s68
      %p72 = scmp.eq.s32.totalorder %s11, 0
      %p73 = por %p71, %p72
      %p74 = scmp.ne.s32.totalorder %s66, %s68
      %p75 = scmp.eq.s32.totalorder %s16, 1
      %p76 = por %p74, %p75
      %p77 = scmp.ne.s32.totalorder %s68, %s69
      %p78 = scmp.eq.s32.totalorder %s16, 0
      %p79 = por %p77, %p78
      %p80 = scmp.ne.s32.totalorder %s68, %s69
      %p81 = scmp.eq.s32.totalorder %s17, 1
      %p82 = por %p80, %p81
      %p84 = scmp.ne.s32.totalorder %s69, %s83
      %p85 = scmp.eq.s32.totalorder %s17, 0
      %p86 = por %p84, %p85
      %s88 = sadd.s32 %s87, 1
      %p91 = scmp.eq.s32.totalorder %s11, 1
      %p92 = scmp.ne.s32.totalorder %s87, %s89
      %p93 = scmp.eq.s32.totalorder %s11, 0
      %p94 = por %p92, %p93
      %p95 = scmp.ne.s32.totalorder %s87, %s89
      %p96 = scmp.eq.s32.totalorder %s16, 1
      %p97 = por %p95, %p96
      %p98 = scmp.ne.s32.totalorder %s89, %s90
      %p99 = scmp.eq.s32.totalorder %s16, 0
      %p100 = por %p98, %p99
      %p101 = scmp.ne.s32.totalorder %s89, %s90
      %p102 = scmp.eq.s32.totalorder %s17, 1
      %p103 = por %p101, %p102
      %p105 = scmp.ne.s32.totalorder %s90, %s104
      %p106 = scmp.eq.s32.totalorder %s17, 0
      %p107 = por %p105, %p106
      %s109 = sadd.s32 %s108, 1
      %p112 = scmp.eq.s32.totalorder %s11, 1
      %p113 = scmp.ne.s32.totalorder %s108, %s110
      %p114 = scmp.eq.s32.totalorder %s11, 0
      %p115 = por %p113, %p114
      %p116 = scmp.ne.s32.totalorder %s108, %s110
      %p117 = scmp.eq.s32.totalorder %s16, 1
      %p118 = por %p116, %p117
      %p119 = scmp.ne.s32.totalorder %s110, %s111
      %p120 = scmp.eq.s32.totalorder %s16, 0
      %p121 = por %p119, %p120
      %p122 = scmp.ne.s32.totalorder %s110, %s111
      %p123 = scmp.eq.s32.totalorder %s17, 1
      %p124 = por %p122, %p123
      %p126 = scmp.ne.s32.totalorder %s111, %s125
      %p127 = scmp.eq.s32.totalorder %s17, 0
      %p128 = por %p126, %p127
      %s129 = ssub.s32 %s11, %s18
      %p130 = scmp.eq.s32.totalorder %s129, 0
      %s132 = sadd.s32 %s131, 1
      %s133 = scalar_select %p130, %s131, %s132
      %p136 = pneg %p130
      %p137 = scmp.eq.s32.totalorder %s11, 1
      %p138 = por %p136, %p137
      %p139 = scmp.ne.s32.totalorder %s131, %s134
      %p140 = scmp.eq.s32.totalorder %s11, 0
      %p141 = por %p139, %p140
      %p142 = scmp.ne.s32.totalorder %s131, %s134
      %p143 = scmp.eq.s32.totalorder %s16, 1
      %p144 = por %p142, %p143
      %p145 = scmp.ne.s32.totalorder %s134, %s135
      %p146 = scmp.eq.s32.totalorder %s16, 0
      %p147 = por %p145, %p146
      %p148 = scmp.ne.s32.totalorder %s134, %s135
      %p149 = scmp.eq.s32.totalorder %s17, 1
      %p150 = por %p148, %p149
      %p152 = scmp.ne.s32.totalorder %s135, %s151
      %p153 = scmp.eq.s32.totalorder %s17, 0
      %p154 = por %p152, %p153
      %p155 = scmp.le.s32.totalorder 1, %s11
      %p156 = scmp.lt.s32.totalorder %s11, 3
      %p157 = pnand %p155, %p156
      %p158 = pneg %p157
      // Predicated region
      $region9: #{breakdown_conv2d_block.1} parent=5 // pred_check
        _
      $region10: #{breakdown_conv2d_block.1} parent=5 // pred_check_branch
        %160 = sbr.rel (%p157) target = $region12
      $region11: #{breakdown_conv2d_block.1} parent=5 // pred_region
        %s161 = ssub.s32 %s11, 1
        // Predicated region
        $region13: #{breakdown_conv2d_block.1} parent=11 // pred_check
          %p162 = pneg %p58
        $region14: #{breakdown_conv2d_block.1} parent=11 // pred_check_branch
          %164 = sbr.rel (%p162) target = $region16
        $region15: #{breakdown_conv2d_block.1} parent=11 // pred_region
          _
        $region16: #{breakdown_conv2d_block.1} parent=11 // pred_fallthru
          _
        // Predicated region
        $region17: #{breakdown_conv2d_block.1} parent=11 // pred_check
          %p165 = pneg %p79
        $region18: #{breakdown_conv2d_block.1} parent=11 // pred_check_branch
          %167 = sbr.rel (%p165) target = $region20
        $region19: #{breakdown_conv2d_block.1} parent=11 // pred_region
          _
        $region20: #{breakdown_conv2d_block.1} parent=11 // pred_fallthru
          _
        // Predicated region
        $region21: #{breakdown_conv2d_block.1} parent=11 // pred_check
          %p168 = pneg %p100
        $region22: #{breakdown_conv2d_block.1} parent=11 // pred_check_branch
          %170 = sbr.rel (%p168) target = $region24
        $region23: #{breakdown_conv2d_block.1} parent=11 // pred_region
          _
        $region24: #{breakdown_conv2d_block.1} parent=11 // pred_fallthru
          _
        // Predicated region
        $region25: #{breakdown_conv2d_block.1} parent=11 // pred_check
          %p171 = pneg %p121
        $region26: #{breakdown_conv2d_block.1} parent=11 // pred_check_branch
          %173 = sbr.rel (%p171) target = $region28
        $region27: #{breakdown_conv2d_block.1} parent=11 // pred_region
          _
        $region28: #{breakdown_conv2d_block.1} parent=11 // pred_fallthru
          _
      $region12: #{breakdown_conv2d_block.1} parent=5 // pred_fallthru
        _
      %p174 = scmp.lt.s32.totalorder %s11, 2
      // Predicated region
      $region29: #{breakdown_conv2d_block.1} parent=5 // pred_check
        %p175 = pneg %p174
      $region30: #{breakdown_conv2d_block.1} parent=5 // pred_check_branch
        %177 = sbr.rel (%p175) target = $region32
      $region31: #{breakdown_conv2d_block.1} parent=5 // pred_region
        // Predicated region
        $region33: #{breakdown_conv2d_block.1} parent=31 // pred_check
          %p178 = pneg %p31
        $region34: #{breakdown_conv2d_block.1} parent=31 // pred_check_branch
          %180 = sbr.rel (%p178) target = $region36
        $region35: #{breakdown_conv2d_block.1} parent=31 // pred_region
          %s181 = smul.u32 26, %s11
          %s182 = ssub.s32 49, %s181
          %p183 = scmp.lt.s32.totalorder %s182, 26
          %s184 = scalar_select %p183, %s182, 26
          %s185 = smul.u32 4, %s184
          %p186 = scmp.lt.s32.totalorder %s181, 48
          %s187 = scalar_select %p186, %s181, 48
          %s188 = smul.addr %s187, 4
          %s189 = scalar_lea.vmem %s0, %s188
          %s190 = smul.u32 26, %s11
          %s191 = ssub.s32 49, %s190
          %p192 = scmp.lt.s32.totalorder %s191, 26
          %s193 = scalar_select %p192, %s191, 26
          %s194 = smul.u32 4, %s193
        $region36: #{breakdown_conv2d_block.1} parent=31 // pred_fallthru
          _
      $region32: #{breakdown_conv2d_block.1} parent=5 // pred_fallthru
        _
      %p195 = scmp.le.s32.totalorder 1, %s11
      %p196 = scmp.lt.s32.totalorder %s11, 3
      %p197 = pnand %p195, %p196
      %p198 = pneg %p197
      // Predicated region
      $region37: #{breakdown_conv2d_block.1} parent=5 // pred_check
        _
      $region38: #{breakdown_conv2d_block.1} parent=5 // pred_check_branch
        %200 = sbr.rel (%p197) target = $region40
      $region39: #{breakdown_conv2d_block.1} parent=5 // pred_region
        %s201 = ssub.s32 %s11, 1
        %s202 = smul.u32 26, %s16
        %s203 = ssub.s32 49, %s202
        %p204 = scmp.lt.s32.totalorder %s203, 26
        %s205 = scalar_select %p204, %s203, 26
        %s206 = smul.u32 4, %s205
        %p207 = scmp.lt.s32.totalorder %s202, 48
        %s208 = scalar_select %p207, %s202, 48
        %s209 = smul.addr %s208, 4
        %s210 = scalar_lea.vmem %s0, %s209
        %p211 = pneg %p37
        %p212 = pneg %p34
        %p213 = pneg %p58
        %p214 = pneg %p55
        %p215 = pneg %p79
        %p216 = pneg %p76
        %p217 = pneg %p100
        %p218 = pneg %p97
        %p219 = pneg %p121
        %p220 = pneg %p118
        %p221 = pneg %p147
        %p222 = pneg %p144
        %s223 = sand.u32 %s134, 1
        %s224 = sand.u32 %s134, 1
        %s225 = smul.addr %s224, 208
        %s226 = scalar_lea.vmem [#allocation2], %s225
        %s227 = smul.u32 26, %s16
        %s228 = ssub.s32 49, %s227
        %p229 = scmp.lt.s32.totalorder %s228, 26
        %s230 = scalar_select %p229, %s228, 26
        %s231 = smul.u32 4, %s230
        %p232 = scmp.lt.s32.totalorder %s227, 48
        %s233 = scalar_select %p232, %s227, 48
        %s234 = smul.addr %s233, 4
        %s235 = scalar_lea.vmem %s0, %s234
        %s236 = smul.u32 26, %s16
        %s237 = ssub.s32 49, %s236
        %p238 = scmp.lt.s32.totalorder %s237, 26
        %s239 = scalar_select %p238, %s237, 26
        %s240 = smul.u32 4, %s239
        %s241 = smul.u32 26, %s16
        %s242 = ssub.s32 49, %s241
        %p243 = scmp.lt.s32.totalorder %s242, 26
        %s244 = scalar_select %p243, %s242, 26
        %s245 = smul.u32 8, %s244
        %v247 = vld [vmem:[%s235] sm:$0xf]
        %v248 = vld [vmem:[%s235 + $0x4] sm:$0xf]
        %v249 = vld [vmem:[%s235 + $0x8] sm:$0xf]
        %v250 = vld [vmem:[%s235 + $0xc] sm:$0xf]
        %v251 = vld [vmem:[%s235 + $0x10] sm:$0xf]
        %v252 = vld [vmem:[%s235 + $0x14] sm:$0xf]
        %v253 = vld [vmem:[%s235 + $0x18] sm:$0xf]
        %v254 = vld [vmem:[%s235 + $0x1c] sm:$0xf]
        %v255 = vld [vmem:[%s235 + $0x20] sm:$0xf]
        %v256 = vld [vmem:[%s235 + $0x24] sm:$0xf]
        %v257 = vld [vmem:[%s235 + $0x28] sm:$0xf]
        %v258 = vld [vmem:[%s235 + $0x2c] sm:$0xf]
        %v259 = vld [vmem:[%s235 + $0x30] sm:$0xf]
        %v260 = vld [vmem:[%s235 + $0x34] sm:$0xf]
        %v261 = vld [vmem:[%s235 + $0x38] sm:$0xf]
        %v262 = vld [vmem:[%s235 + $0x3c] sm:$0xf]
        %v263 = vld [vmem:[%s235 + $0x40] sm:$0xf]
        %v264 = vld [vmem:[%s235 + $0x44] sm:$0xf]
        %v265 = vld [vmem:[%s235 + $0x48] sm:$0xf]
        %v266 = vld [vmem:[%s235 + $0x4c] sm:$0xf]
        %v267 = vld [vmem:[%s235 + $0x50] sm:$0xf]
        %v268 = vld [vmem:[%s235 + $0x54] sm:$0xf]
        %v269 = vld [vmem:[%s235 + $0x58] sm:$0xf]
        %v270 = vld [vmem:[%s235 + $0x5c] sm:$0xf]
        %v271 = vld [vmem:[%s235 + $0x60] sm:$0xf]
        %v272 = vld [vmem:[%s235 + $0x64] sm:$0xf]
        %v273 = vld [vmem:[%s1] sm:$0xf]
        %v274 = vld [vmem:[%s1 + $0x4] sm:$0xf]
        %v275 = vld [vmem:[%s1 + $0x8] sm:$0xf]
        %v276 = vld [vmem:[%s1 + $0xc] sm:$0xf]
        %v277 = vld [vmem:[%s1 + $0x10] sm:$0x3]
        %v278 = vld [vmem:[%s2] sm:$0x1]
        %v280 = vperm.slane %v278, 0
        %v308 = vunpack.c.l.b16 %v247
        %v309 = vunpack.c.l.b16 %v248
        %v310 = vunpack.c.l.b16 %v249
        %v311 = vunpack.c.l.b16 %v250
        %v312 = vunpack.c.l.b16 %v251
        %v313 = vunpack.c.l.b16 %v252
        %v314 = vunpack.c.l.b16 %v253
        %v315 = vunpack.c.l.b16 %v254
        %v316 = vunpack.c.l.b16 %v255
        %v317 = vunpack.c.l.b16 %v256
        %v318 = vunpack.c.l.b16 %v257
        %v319 = vunpack.c.l.b16 %v258
        %v320 = vunpack.c.l.b16 %v259
        %v321 = vunpack.c.l.b16 %v260
        %v322 = vunpack.c.l.b16 %v261
        %v323 = vunpack.c.l.b16 %v262
        %v324 = vunpack.c.l.b16 %v263
        %v325 = vunpack.c.l.b16 %v264
        %v326 = vunpack.c.l.b16 %v265
        %v327 = vunpack.c.l.b16 %v266
        %v328 = vunpack.c.l.b16 %v267
        %v329 = vunpack.c.l.b16 %v268
        %v330 = vunpack.c.l.b16 %v269
        %v331 = vunpack.c.l.b16 %v270
        %v332 = vunpack.c.l.b16 %v271
        %v333 = vunpack.c.l.b16 %v272
        %v334 = vpack.c.b16 %v309, %v308
        %v335 = vpack.c.b16 %v311, %v310
        %v336 = vpack.c.b16 %v313, %v312
        %v337 = vpack.c.b16 %v315, %v314
        %v338 = vpack.c.b16 %v317, %v316
        %v339 = vpack.c.b16 %v319, %v318
        %v340 = vpack.c.b16 %v321, %v320
        %v341 = vpack.c.b16 %v323, %v322
        %v342 = vpack.c.b16 %v325, %v324
        %v343 = vpack.c.b16 %v327, %v326
        %v344 = vpack.c.b16 %v329, %v328
        %v345 = vpack.c.b16 %v331, %v330
        %v346 = vpack.c.b16 %v333, %v332
        %v352 = vunpack.c.l.b16 %v273
        %v353 = vunpack.c.l.b16 %v274
        %v354 = vunpack.c.l.b16 %v275
        %v355 = vunpack.c.l.b16 %v276
        %v356 = vunpack.c.l.b16 %v277
        %v357 = vpack.c.b16 %v353, %v352
        %v358 = vpack.c.b16 %v355, %v354
        %v359 = vpack.c.b16 %v356, %v356
        %vm362 = vcmask 293888
        %v364 = vsel %vm362, %v334, 0
        %v367 = vsel %vm362, %v335, 0
        %v370 = vsel %vm362, %v336, 0
        %v373 = vsel %vm362, %v337, 0
        %v376 = vsel %vm362, %v338, 0
        %v379 = vsel %vm362, %v339, 0
        %v382 = vsel %vm362, %v340, 0
        %v385 = vsel %vm362, %v341, 0
        %v388 = vsel %vm362, %v342, 0
        %v391 = vsel %vm362, %v343, 0
        %v394 = vsel %vm362, %v344, 0
        %v397 = vsel %vm362, %v345, 0
        %v400 = vsel %vm362, %v346, 0
        %vm402 = vcmask 1041408
        %v404 = vsel %vm402, %v359, 0
        %406 = vmatpush.bf16.msra.mxu0 0
        %407 = vmatpush.bf16.msra.mxu0 0
        %408 = vmatpush.bf16.msra.mxu0 0
        %409 = vmatpush.bf16.msra.mxu0 0
        %410 = vmatpush.bf16.msra.mxu0 0
        %411 = vmatpush.bf16.msra.mxu0 %v404
        %412 = vmatpush.bf16.msra.mxu0 %v358
        %413 = vmatpush.bf16.msra.mxu0 %v357
        %414 = vmatmul.bf16.gmra.mxu0 %v364
        %v415 = vpop.f32.mrf.mxu0
        %v416 = vadd.f32 %v280, %v415
        %v417 = vpop.f32.mrf.mxu0
        %v418 = vadd.f32 %v280, %v417
        %419 = vmatmul.bf16.gmra.mxu0 %v367
        %v420 = vpop.f32.mrf.mxu0
        %v421 = vadd.f32 %v280, %v420
        %v422 = vpop.f32.mrf.mxu0
        %v423 = vadd.f32 %v280, %v422
        %424 = vmatmul.bf16.gmra.mxu0 %v370
        %v425 = vpop.f32.mrf.mxu0
        %v426 = vadd.f32 %v280, %v425
        %v427 = vpop.f32.mrf.mxu0
        %v428 = vadd.f32 %v280, %v427
        %429 = vmatmul.bf16.gmra.mxu0 %v373
        %v430 = vpop.f32.mrf.mxu0
        %v431 = vadd.f32 %v280, %v430
        %v432 = vpop.f32.mrf.mxu0
        %v433 = vadd.f32 %v280, %v432
        %434 = vmatmul.bf16.gmra.mxu0 %v376
        %v435 = vpop.f32.mrf.mxu0
        %v436 = vadd.f32 %v280, %v435
        %v437 = vpop.f32.mrf.mxu0
        %v438 = vadd.f32 %v280, %v437
        %439 = vmatmul.bf16.gmra.mxu0 %v379
        %v440 = vpop.f32.mrf.mxu0
        %v441 = vadd.f32 %v280, %v440
        %v442 = vpop.f32.mrf.mxu0
        %v443 = vadd.f32 %v280, %v442
        %444 = vmatmul.bf16.gmra.mxu0 %v382
        %v445 = vpop.f32.mrf.mxu0
        %v446 = vadd.f32 %v280, %v445
        %v447 = vpop.f32.mrf.mxu0
        %v448 = vadd.f32 %v280, %v447
        %449 = vmatmul.bf16.gmra.mxu0 %v385
        %v450 = vpop.f32.mrf.mxu0
        %v451 = vadd.f32 %v280, %v450
        %v452 = vpop.f32.mrf.mxu0
        %v453 = vadd.f32 %v280, %v452
        %454 = vmatmul.bf16.gmra.mxu0 %v388
        %v455 = vpop.f32.mrf.mxu0
        %v456 = vadd.f32 %v280, %v455
        %v457 = vpop.f32.mrf.mxu0
        %v458 = vadd.f32 %v280, %v457
        %459 = vmatmul.bf16.gmra.mxu0 %v391
        %v460 = vpop.f32.mrf.mxu0
        %v461 = vadd.f32 %v280, %v460
        %v462 = vpop.f32.mrf.mxu0
        %v463 = vadd.f32 %v280, %v462
        %464 = vmatmul.bf16.gmra.mxu0 %v394
        %v465 = vpop.f32.mrf.mxu0
        %v466 = vadd.f32 %v280, %v465
        %v467 = vpop.f32.mrf.mxu0
        %v468 = vadd.f32 %v280, %v467
        %469 = vmatmul.bf16.gmra.mxu0 %v397
        %v470 = vpop.f32.mrf.mxu0
        %v471 = vadd.f32 %v280, %v470
        %v472 = vpop.f32.mrf.mxu0
        %v473 = vadd.f32 %v280, %v472
        %474 = vmatmul.bf16.gmra.mxu0 %v400
        %v475 = vpop.f32.mrf.mxu0
        %v476 = vadd.f32 %v280, %v475
        %v477 = vpop.f32.mrf.mxu0
        %v478 = vadd.f32 %v280, %v477
        %479 = vdwg.mxu0
        %v480 = vmax.f32 %v416, 0.0
        %v481 = vmax.f32 %v418, 0.0
        %v482 = vmax.f32 %v421, 0.0
        %v483 = vmax.f32 %v423, 0.0
        %v484 = vmax.f32 %v426, 0.0
        %v485 = vmax.f32 %v428, 0.0
        %v486 = vmax.f32 %v431, 0.0
        %v487 = vmax.f32 %v433, 0.0
        %v488 = vmax.f32 %v436, 0.0
        %v489 = vmax.f32 %v438, 0.0
        %v490 = vmax.f32 %v441, 0.0
        %v491 = vmax.f32 %v443, 0.0
        %v492 = vmax.f32 %v446, 0.0
        %v493 = vmax.f32 %v448, 0.0
        %v494 = vmax.f32 %v451, 0.0
        %v495 = vmax.f32 %v453, 0.0
        %v496 = vmax.f32 %v456, 0.0
        %v497 = vmax.f32 %v458, 0.0
        %v498 = vmax.f32 %v461, 0.0
        %v499 = vmax.f32 %v463, 0.0
        %v500 = vmax.f32 %v466, 0.0
        %v501 = vmax.f32 %v468, 0.0
        %v502 = vmax.f32 %v471, 0.0
        %v503 = vmax.f32 %v473, 0.0
        %v504 = vmax.f32 %v476, 0.0
        %v505 = vmax.f32 %v478, 0.0
        %v506 = vpack.c.bf16 %v481, %v480
        %v507 = vpack.c.bf16 %v483, %v482
        %v508 = vpack.c.bf16 %v485, %v484
        %v509 = vpack.c.bf16 %v487, %v486
        %v510 = vpack.c.bf16 %v489, %v488
        %v511 = vpack.c.bf16 %v491, %v490
        %v512 = vpack.c.bf16 %v493, %v492
        %v513 = vpack.c.bf16 %v495, %v494
        %v514 = vpack.c.bf16 %v497, %v496
        %v515 = vpack.c.bf16 %v499, %v498
        %v516 = vpack.c.bf16 %v501, %v500
        %v517 = vpack.c.bf16 %v503, %v502
        %v518 = vpack.c.bf16 %v505, %v504
        %v519 = vld [vmem:[%s3] sm:$0xf]
        %v520 = vld [vmem:[%s3 + $0x4] sm:$0xf]
        %v521 = vld [vmem:[%s3 + $0x8] sm:$0xf]
        %v522 = vld [vmem:[%s3 + $0xc] sm:$0xf]
        %v523 = vld [vmem:[%s3 + $0x10] sm:$0xf]
        %v524 = vld [vmem:[%s3 + $0x14] sm:$0xf]
        %v525 = vld [vmem:[%s3 + $0x18] sm:$0xf]
        %v526 = vld [vmem:[%s3 + $0x1c] sm:$0xf]
        %v527 = vld [vmem:[%s3 + $0x20] sm:$0xf]
        %v528 = vld [vmem:[%s3 + $0x24] sm:$0xf]
        %v529 = vld [vmem:[%s3 + $0x28] sm:$0xf]
        %v530 = vld [vmem:[%s3 + $0x2c] sm:$0xf]
        %v531 = vld [vmem:[%s3 + $0x30] sm:$0xf]
        %v532 = vld [vmem:[%s3 + $0x34] sm:$0xf]
        %v533 = vld [vmem:[%s3 + $0x38] sm:$0xf]
        %v534 = vld [vmem:[%s3 + $0x3c] sm:$0xf]
        %v535 = vld [vmem:[%s4] sm:$0x1]
        %v537 = vperm.slane %v535, 0
        %v555 = vunpack.c.l.b16 %v519
        %v556 = vunpack.c.l.b16 %v520
        %v557 = vunpack.c.l.b16 %v521
        %v558 = vunpack.c.l.b16 %v522
        %v559 = vunpack.c.l.b16 %v523
        %v560 = vunpack.c.l.b16 %v524
        %v561 = vunpack.c.l.b16 %v525
        %v562 = vunpack.c.l.b16 %v526
        %v563 = vunpack.c.l.b16 %v527
        %v564 = vunpack.c.l.b16 %v528
        %v565 = vunpack.c.l.b16 %v529
        %v566 = vunpack.c.l.b16 %v530
        %v567 = vunpack.c.l.b16 %v531
        %v568 = vunpack.c.l.b16 %v532
        %v569 = vunpack.c.l.b16 %v533
        %v570 = vunpack.c.l.b16 %v534
        %v571 = vpack.c.b16 %v556, %v555
        %v572 = vpack.c.b16 %v558, %v557
        %v573 = vpack.c.b16 %v560, %v559
        %v574 = vpack.c.b16 %v562, %v561
        %v575 = vpack.c.b16 %v564, %v563
        %v576 = vpack.c.b16 %v566, %v565
        %v577 = vpack.c.b16 %v568, %v567
        %v578 = vpack.c.b16 %v570, %v569
        %587 = vmatpush.bf16.msra.mxu0 %v578
        %588 = vmatpush.bf16.msra.mxu0 %v577
        %589 = vmatpush.bf16.msra.mxu0 %v576
        %590 = vmatpush.bf16.msra.mxu0 %v575
        %591 = vmatpush.bf16.msra.mxu0 %v574
        %592 = vmatpush.bf16.msra.mxu0 %v573
        %593 = vmatpush.bf16.msra.mxu0 %v572
        %594 = vmatpush.bf16.msra.mxu0 %v571
        %595 = vmatmul.bf16.gmra.mxu0 %v506
        %v596 = vpop.f32.mrf.mxu0
        %v597 = vadd.f32 %v537, %v596
        %v598 = vpop.f32.mrf.mxu0
        %v599 = vadd.f32 %v537, %v598
        %600 = vmatmul.bf16.gmra.mxu0 %v507
        %v601 = vpop.f32.mrf.mxu0
        %v602 = vadd.f32 %v537, %v601
        %v603 = vpop.f32.mrf.mxu0
        %v604 = vadd.f32 %v537, %v603
        %605 = vmatmul.bf16.gmra.mxu0 %v508
        %v606 = vpop.f32.mrf.mxu0
        %v607 = vadd.f32 %v537, %v606
        %v608 = vpop.f32.mrf.mxu0
        %v609 = vadd.f32 %v537, %v608
        %610 = vmatmul.bf16.gmra.mxu0 %v509
        %v611 = vpop.f32.mrf.mxu0
        %v612 = vadd.f32 %v537, %v611
        %v613 = vpop.f32.mrf.mxu0
        %v614 = vadd.f32 %v537, %v613
        %615 = vmatmul.bf16.gmra.mxu0 %v510
        %v616 = vpop.f32.mrf.mxu0
        %v617 = vadd.f32 %v537, %v616
        %v618 = vpop.f32.mrf.mxu0
        %v619 = vadd.f32 %v537, %v618
        %620 = vmatmul.bf16.gmra.mxu0 %v511
        %v621 = vpop.f32.mrf.mxu0
        %v622 = vadd.f32 %v537, %v621
        %v623 = vpop.f32.mrf.mxu0
        %v624 = vadd.f32 %v537, %v623
        %625 = vmatmul.bf16.gmra.mxu0 %v512
        %v626 = vpop.f32.mrf.mxu0
        %v627 = vadd.f32 %v537, %v626
        %v628 = vpop.f32.mrf.mxu0
        %v629 = vadd.f32 %v537, %v628
        %630 = vmatmul.bf16.gmra.mxu0 %v513
        %v631 = vpop.f32.mrf.mxu0
        %v632 = vadd.f32 %v537, %v631
        %v633 = vpop.f32.mrf.mxu0
        %v634 = vadd.f32 %v537, %v633
        %635 = vmatmul.bf16.gmra.mxu0 %v514
        %v636 = vpop.f32.mrf.mxu0
        %v637 = vadd.f32 %v537, %v636
        %v638 = vpop.f32.mrf.mxu0
        %v639 = vadd.f32 %v537, %v638
        %640 = vmatmul.bf16.gmra.mxu0 %v515
        %v641 = vpop.f32.mrf.mxu0
        %v642 = vadd.f32 %v537, %v641
        %v643 = vpop.f32.mrf.mxu0
        %v644 = vadd.f32 %v537, %v643
        %645 = vmatmul.bf16.gmra.mxu0 %v516
        %v646 = vpop.f32.mrf.mxu0
        %v647 = vadd.f32 %v537, %v646
        %v648 = vpop.f32.mrf.mxu0
        %v649 = vadd.f32 %v537, %v648
        %650 = vmatmul.bf16.gmra.mxu0 %v517
        %v651 = vpop.f32.mrf.mxu0
        %v652 = vadd.f32 %v537, %v651
        %v653 = vpop.f32.mrf.mxu0
        %v654 = vadd.f32 %v537, %v653
        %655 = vmatmul.bf16.gmra.mxu0 %v518
        %v656 = vpop.f32.mrf.mxu0
        %v657 = vadd.f32 %v537, %v656
        %v658 = vpop.f32.mrf.mxu0
        %v659 = vadd.f32 %v537, %v658
        %660 = vdwg.mxu0
        %v661 = vmax.f32 %v597, 0.0
        %v662 = vmax.f32 %v599, 0.0
        %v663 = vmax.f32 %v602, 0.0
        %v664 = vmax.f32 %v604, 0.0
        %v665 = vmax.f32 %v607, 0.0
        %v666 = vmax.f32 %v609, 0.0
        %v667 = vmax.f32 %v612, 0.0
        %v668 = vmax.f32 %v614, 0.0
        %v669 = vmax.f32 %v617, 0.0
        %v670 = vmax.f32 %v619, 0.0
        %v671 = vmax.f32 %v622, 0.0
        %v672 = vmax.f32 %v624, 0.0
        %v673 = vmax.f32 %v627, 0.0
        %v674 = vmax.f32 %v629, 0.0
        %v675 = vmax.f32 %v632, 0.0
        %v676 = vmax.f32 %v634, 0.0
        %v677 = vmax.f32 %v637, 0.0
        %v678 = vmax.f32 %v639, 0.0
        %v679 = vmax.f32 %v642, 0.0
        %v680 = vmax.f32 %v644, 0.0
        %v681 = vmax.f32 %v647, 0.0
        %v682 = vmax.f32 %v649, 0.0
        %v683 = vmax.f32 %v652, 0.0
        %v684 = vmax.f32 %v654, 0.0
        %v685 = vmax.f32 %v657, 0.0
        %v686 = vmax.f32 %v659, 0.0
        %687 = vst [vmem:[%s226] sm:$0xff] %v661
        %688 = vst [vmem:[%s226 + $0x8] sm:$0xff] %v662
        %689 = vst [vmem:[%s226 + $0x10] sm:$0xff] %v663
        %690 = vst [vmem:[%s226 + $0x18] sm:$0xff] %v664
        %691 = vst [vmem:[%s226 + $0x20] sm:$0xff] %v665
        %692 = vst [vmem:[%s226 + $0x28] sm:$0xff] %v666
        %693 = vst [vmem:[%s226 + $0x30] sm:$0xff] %v667
        %694 = vst [vmem:[%s226 + $0x38] sm:$0xff] %v668
        %695 = vst [vmem:[%s226 + $0x40] sm:$0xff] %v669
        %696 = vst [vmem:[%s226 + $0x48] sm:$0xff] %v670
        %697 = vst [vmem:[%s226 + $0x50] sm:$0xff] %v671
        %698 = vst [vmem:[%s226 + $0x58] sm:$0xff] %v672
        %699 = vst [vmem:[%s226 + $0x60] sm:$0xff] %v673
        %700 = vst [vmem:[%s226 + $0x68] sm:$0xff] %v674
        %701 = vst [vmem:[%s226 + $0x70] sm:$0xff] %v675
        %702 = vst [vmem:[%s226 + $0x78] sm:$0xff] %v676
        %703 = vst [vmem:[%s226 + $0x80] sm:$0xff] %v677
        %704 = vst [vmem:[%s226 + $0x88] sm:$0xff] %v678
        %705 = vst [vmem:[%s226 + $0x90] sm:$0xff] %v679
        %706 = vst [vmem:[%s226 + $0x98] sm:$0xff] %v680
        %707 = vst [vmem:[%s226 + $0xa0] sm:$0xff] %v681
        %708 = vst [vmem:[%s226 + $0xa8] sm:$0xff] %v682
        %709 = vst [vmem:[%s226 + $0xb0] sm:$0xff] %v683
        %710 = vst [vmem:[%s226 + $0xb8] sm:$0xff] %v684
        %711 = vst [vmem:[%s226 + $0xc0] sm:$0xff] %v685
        %712 = vst [vmem:[%s226 + $0xc8] sm:$0xff] %v686
        %s713 = sand.u32 %s134, 1
        %s714 = sand.u32 %s134, 1
        %s715 = smul.addr %s714, 208
        %s716 = scalar_lea.vmem [#allocation2], %s715
        // Predicated region
        $region41: #{breakdown_conv2d_block.1} parent=39 // pred_check
          %p717 = pneg %p144
        $region42: #{breakdown_conv2d_block.1} parent=39 // pred_check_branch
          %719 = sbr.rel (%p717) target = $region44
        $region43: #{breakdown_conv2d_block.1} parent=39 // pred_region
          %s720 = smul.u32 26, %s16
          %s721 = ssub.s32 49, %s720
          %p722 = scmp.lt.s32.totalorder %s721, 26
          %s723 = scalar_select %p722, %s721, 26
          %s724 = smul.u32 8, %s723
          %p725 = scmp.ne.s32.totalorder 0, %s724
          %s726 = smul.addr %s720, 8
          %s727 = scalar_lea.vmem %s5, %s726
          // Predicated region
          $region45: #{breakdown_conv2d_block.1} parent=43 // pred_check
            %p728 = pneg %p725
          $region46: #{breakdown_conv2d_block.1} parent=43 // pred_check_branch
            %730 = sbr.rel (%p728) target = $region48
          $region47: #{breakdown_conv2d_block.1} parent=43 // pred_region
            // Predicated region
            $region49: #{breakdown_conv2d_block.1} parent=47 // pred_check
              _
            $region50: #{breakdown_conv2d_block.1} parent=47 // pred_check_branch
              %732 = sbr.rel (0) target = $region52
            $region51: #{breakdown_conv2d_block.1} parent=47 // pred_region
              // Predicated region
              $region71: #{breakdown_conv2d_block.1} parent=51 // pred_check
                _
              $region72: #{breakdown_conv2d_block.1} parent=51 // pred_check_branch
                %833 = sbr.rel (0) target = $region74
              $region73: #{breakdown_conv2d_block.1} parent=51 // pred_region
                %s834 = sdiv.u32.pop %s723, 26
                %s835 = srem.u32.pop %s723, 26
                // While loop
                $region75: #{breakdown_conv2d_block.1} parent=73 // loop_pre_header
                  _
                $region76: #{breakdown_conv2d_block.1} parent=73 // loop_header
                  %s837 = sphi 0, %s839
                  %p838 = scmp.ge.s32.totalorder %s837, %s834
                  %s842 = sphi 0, %s899
                  %s843 = sphi %s716, %s902
                  %s844 = sphi %s727, %s903
                $region77: #{breakdown_conv2d_block.1} parent=73 // loop_header_branch
                  %841 = sbr.rel (%p838) target = $region81
                $region78: #{breakdown_conv2d_block.1} parent=73 // loop_body
                  %v845 = vld [vmem:[%s843] sm:$0xff]
                  %846 = vst [vmem:[%s844] sm:$0xff] %v845
                  %v847 = vld [vmem:[%s843 + $0x8] sm:$0xff]
                  %848 = vst [vmem:[%s844 + $0x8] sm:$0xff] %v847
                  %v849 = vld [vmem:[%s843 + $0x10] sm:$0xff]
                  %850 = vst [vmem:[%s844 + $0x10] sm:$0xff] %v849
                  %v851 = vld [vmem:[%s843 + $0x18] sm:$0xff]
                  %852 = vst [vmem:[%s844 + $0x18] sm:$0xff] %v851
                  %v853 = vld [vmem:[%s843 + $0x20] sm:$0xff]
                  %854 = vst [vmem:[%s844 + $0x20] sm:$0xff] %v853
                  %v855 = vld [vmem:[%s843 + $0x28] sm:$0xff]
                  %856 = vst [vmem:[%s844 + $0x28] sm:$0xff] %v855
                  %v857 = vld [vmem:[%s843 + $0x30] sm:$0xff]
                  %858 = vst [vmem:[%s844 + $0x30] sm:$0xff] %v857
                  %v859 = vld [vmem:[%s843 + $0x38] sm:$0xff]
                  %860 = vst [vmem:[%s844 + $0x38] sm:$0xff] %v859
                  %v861 = vld [vmem:[%s843 + $0x40] sm:$0xff]
                  %862 = vst [vmem:[%s844 + $0x40] sm:$0xff] %v861
                  %v863 = vld [vmem:[%s843 + $0x48] sm:$0xff]
                  %864 = vst [vmem:[%s844 + $0x48] sm:$0xff] %v863
                  %v865 = vld [vmem:[%s843 + $0x50] sm:$0xff]
                  %866 = vst [vmem:[%s844 + $0x50] sm:$0xff] %v865
                  %v867 = vld [vmem:[%s843 + $0x58] sm:$0xff]
                  %868 = vst [vmem:[%s844 + $0x58] sm:$0xff] %v867
                  %v869 = vld [vmem:[%s843 + $0x60] sm:$0xff]
                  %870 = vst [vmem:[%s844 + $0x60] sm:$0xff] %v869
                  %v871 = vld [vmem:[%s843 + $0x68] sm:$0xff]
                  %872 = vst [vmem:[%s844 + $0x68] sm:$0xff] %v871
                  %v873 = vld [vmem:[%s843 + $0x70] sm:$0xff]
                  %874 = vst [vmem:[%s844 + $0x70] sm:$0xff] %v873
                  %v875 = vld [vmem:[%s843 + $0x78] sm:$0xff]
                  %876 = vst [vmem:[%s844 + $0x78] sm:$0xff] %v875
                  %v877 = vld [vmem:[%s843 + $0x80] sm:$0xff]
                  %878 = vst [vmem:[%s844 + $0x80] sm:$0xff] %v877
                  %v879 = vld [vmem:[%s843 + $0x88] sm:$0xff]
                  %880 = vst [vmem:[%s844 + $0x88] sm:$0xff] %v879
                  %v881 = vld [vmem:[%s843 + $0x90] sm:$0xff]
                  %882 = vst [vmem:[%s844 + $0x90] sm:$0xff] %v881
                  %v883 = vld [vmem:[%s843 + $0x98] sm:$0xff]
                  %884 = vst [vmem:[%s844 + $0x98] sm:$0xff] %v883
                  %v885 = vld [vmem:[%s843 + $0xa0] sm:$0xff]
                  %886 = vst [vmem:[%s844 + $0xa0] sm:$0xff] %v885
                  %v887 = vld [vmem:[%s843 + $0xa8] sm:$0xff]
                  %888 = vst [vmem:[%s844 + $0xa8] sm:$0xff] %v887
                  %v889 = vld [vmem:[%s843 + $0xb0] sm:$0xff]
                  %890 = vst [vmem:[%s844 + $0xb0] sm:$0xff] %v889
                  %v891 = vld [vmem:[%s843 + $0xb8] sm:$0xff]
                  %892 = vst [vmem:[%s844 + $0xb8] sm:$0xff] %v891
                  %v893 = vld [vmem:[%s843 + $0xc0] sm:$0xff]
                  %894 = vst [vmem:[%s844 + $0xc0] sm:$0xff] %v893
                  %v895 = vld [vmem:[%s843 + $0xc8] sm:$0xff]
                  %896 = vst [vmem:[%s844 + $0xc8] sm:$0xff] %v895
                  %s897 = sadd.s32 1, %s842
                  %p898 = scmp.ge.s32.totalorder %s897, %s834
                  %s899 = scalar_select %p898, 0, %s897
                  %s900 = smul.u32 %s899, 208
                  %s901 = smul.u32 %s899, 208
                  %s902 = scalar_lea.vmem %s716, %s900 [#allocation2]
                  %s903 = scalar_lea.vmem %s727, %s901
                $region79: #{breakdown_conv2d_block.1} parent=73 // loop_footer
                  %s839 = sadd.s32 %s837, 1
                $region80: #{breakdown_conv2d_block.1} parent=73 // loop_footer_branch
                  %836 = sbr.rel target = $region76
                $region81: #{breakdown_conv2d_block.1} parent=73 // loop_exit
                  _
                %s904 = sdiv.u32.pop %s723, 26
                %s905 = srem.u32.pop %s723, 26
                %s906 = smul.u32 %s904, 26
                %s907 = smul.u32 8, %s906
                %s908 = scalar_lea.vmem %s716, %s907 [#allocation2]
                %s909 = smul.u32 8, %s906
                %s910 = scalar_lea.vmem %s727, %s909
                // While loop
                $region82: #{breakdown_conv2d_block.1} parent=73 // loop_pre_header
                  _
                $region83: #{breakdown_conv2d_block.1} parent=73 // loop_header
                  %s912 = sphi 0, %s914
                  %p913 = scmp.ge.s32.totalorder %s912, %s905
                  %s917 = sphi 0, %s924
                  %s918 = sphi %s908, %s927
                  %s919 = sphi %s910, %s928
                $region84: #{breakdown_conv2d_block.1} parent=73 // loop_header_branch
                  %916 = sbr.rel (%p913) target = $region88
                $region85: #{breakdown_conv2d_block.1} parent=73 // loop_body
                  %v920 = vld [vmem:[%s918] sm:$0xff]
                  %921 = vst [vmem:[%s919] sm:$0xff] %v920
                  %s922 = sadd.s32 1, %s917
                  %p923 = scmp.ge.s32.totalorder %s922, %s905
                  %s924 = scalar_select %p923, 0, %s922
                  %s925 = smul.u32 %s924, 8
                  %s926 = smul.u32 %s924, 8
                  %s927 = scalar_lea.vmem %s908, %s925 [#allocation2]
                  %s928 = scalar_lea.vmem %s910, %s926
                $region86: #{breakdown_conv2d_block.1} parent=73 // loop_footer
                  %s914 = sadd.s32 %s912, 1
                $region87: #{breakdown_conv2d_block.1} parent=73 // loop_footer_branch
                  %911 = sbr.rel target = $region83
                $region88: #{breakdown_conv2d_block.1} parent=73 // loop_exit
                  _
              $region74: #{breakdown_conv2d_block.1} parent=51 // pred_fallthru
                _
              // Predicated region
              $region89: #{breakdown_conv2d_block.1} parent=51 // pred_check
                _
              $region90: #{breakdown_conv2d_block.1} parent=51 // pred_check_branch
                %930 = sbr.rel target = $region92
              $region91: #{breakdown_conv2d_block.1} parent=51 // pred_region
                _
              $region92: #{breakdown_conv2d_block.1} parent=51 // pred_fallthru
                _
            $region52: #{breakdown_conv2d_block.1} parent=47 // pred_fallthru
              _
            // Predicated region
            $region53: #{breakdown_conv2d_block.1} parent=47 // pred_check
              _
            $region54: #{breakdown_conv2d_block.1} parent=47 // pred_check_branch
              %734 = sbr.rel target = $region56
            $region55: #{breakdown_conv2d_block.1} parent=47 // pred_region
              %s736 = ssub.s32 256, 1
              %s737 = sdiv.u32.pop %s723, 26
              %s738 = srem.u32.pop %s723, 26
              // While loop
              $region57: #{breakdown_conv2d_block.1} parent=55 // loop_pre_header
                _
              $region58: #{breakdown_conv2d_block.1} parent=55 // loop_header
                %s740 = sphi 0, %s742
                %p741 = scmp.ge.s32.totalorder %s740, %s737
                %s745 = sphi 0, %s802
                %s746 = sphi %s716, %s805
                %s747 = sphi %s727, %s806
              $region59: #{breakdown_conv2d_block.1} parent=55 // loop_header_branch
                %744 = sbr.rel (%p741) target = $region63
              $region60: #{breakdown_conv2d_block.1} parent=55 // loop_body
                %v748 = vld [vmem:[%s746] sm:%s736]
                %749 = vst [vmem:[%s747] sm:%s736] %v748
                %v750 = vld [vmem:[%s746 + $0x8] sm:%s736]
                %751 = vst [vmem:[%s747 + $0x8] sm:%s736] %v750
                %v752 = vld [vmem:[%s746 + $0x10] sm:%s736]
                %753 = vst [vmem:[%s747 + $0x10] sm:%s736] %v752
                %v754 = vld [vmem:[%s746 + $0x18] sm:%s736]
                %755 = vst [vmem:[%s747 + $0x18] sm:%s736] %v754
                %v756 = vld [vmem:[%s746 + $0x20] sm:%s736]
                %757 = vst [vmem:[%s747 + $0x20] sm:%s736] %v756
                %v758 = vld [vmem:[%s746 + $0x28] sm:%s736]
                %759 = vst [vmem:[%s747 + $0x28] sm:%s736] %v758
                %v760 = vld [vmem:[%s746 + $0x30] sm:%s736]
                %761 = vst [vmem:[%s747 + $0x30] sm:%s736] %v760
                %v762 = vld [vmem:[%s746 + $0x38] sm:%s736]
                %763 = vst [vmem:[%s747 + $0x38] sm:%s736] %v762
                %v764 = vld [vmem:[%s746 + $0x40] sm:%s736]
                %765 = vst [vmem:[%s747 + $0x40] sm:%s736] %v764
                %v766 = vld [vmem:[%s746 + $0x48] sm:%s736]
                %767 = vst [vmem:[%s747 + $0x48] sm:%s736] %v766
                %v768 = vld [vmem:[%s746 + $0x50] sm:%s736]
                %769 = vst [vmem:[%s747 + $0x50] sm:%s736] %v768
                %v770 = vld [vmem:[%s746 + $0x58] sm:%s736]
                %771 = vst [vmem:[%s747 + $0x58] sm:%s736] %v770
                %v772 = vld [vmem:[%s746 + $0x60] sm:%s736]
                %773 = vst [vmem:[%s747 + $0x60] sm:%s736] %v772
                %v774 = vld [vmem:[%s746 + $0x68] sm:%s736]
                %775 = vst [vmem:[%s747 + $0x68] sm:%s736] %v774
                %v776 = vld [vmem:[%s746 + $0x70] sm:%s736]
                %777 = vst [vmem:[%s747 + $0x70] sm:%s736] %v776
                %v778 = vld [vmem:[%s746 + $0x78] sm:%s736]
                %779 = vst [vmem:[%s747 + $0x78] sm:%s736] %v778
                %v780 = vld [vmem:[%s746 + $0x80] sm:%s736]
                %781 = vst [vmem:[%s747 + $0x80] sm:%s736] %v780
                %v782 = vld [vmem:[%s746 + $0x88] sm:%s736]
                %783 = vst [vmem:[%s747 + $0x88] sm:%s736] %v782
                %v784 = vld [vmem:[%s746 + $0x90] sm:%s736]
                %785 = vst [vmem:[%s747 + $0x90] sm:%s736] %v784
                %v786 = vld [vmem:[%s746 + $0x98] sm:%s736]
                %787 = vst [vmem:[%s747 + $0x98] sm:%s736] %v786
                %v788 = vld [vmem:[%s746 + $0xa0] sm:%s736]
                %789 = vst [vmem:[%s747 + $0xa0] sm:%s736] %v788
                %v790 = vld [vmem:[%s746 + $0xa8] sm:%s736]
                %791 = vst [vmem:[%s747 + $0xa8] sm:%s736] %v790
                %v792 = vld [vmem:[%s746 + $0xb0] sm:%s736]
                %793 = vst [vmem:[%s747 + $0xb0] sm:%s736] %v792
                %v794 = vld [vmem:[%s746 + $0xb8] sm:%s736]
                %795 = vst [vmem:[%s747 + $0xb8] sm:%s736] %v794
                %v796 = vld [vmem:[%s746 + $0xc0] sm:%s736]
                %797 = vst [vmem:[%s747 + $0xc0] sm:%s736] %v796
                %v798 = vld [vmem:[%s746 + $0xc8] sm:%s736]
                %799 = vst [vmem:[%s747 + $0xc8] sm:%s736] %v798
                %s800 = sadd.s32 1, %s745
                %p801 = scmp.ge.s32.totalorder %s800, %s737
                %s802 = scalar_select %p801, 0, %s800
                %s803 = smul.u32 %s802, 208
                %s804 = smul.u32 %s802, 208
                %s805 = scalar_lea.vmem %s716, %s803 [#allocation2]
                %s806 = scalar_lea.vmem %s727, %s804
              $region61: #{breakdown_conv2d_block.1} parent=55 // loop_footer
                %s742 = sadd.s32 %s740, 1
              $region62: #{breakdown_conv2d_block.1} parent=55 // loop_footer_branch
                %739 = sbr.rel target = $region58
              $region63: #{breakdown_conv2d_block.1} parent=55 // loop_exit
                _
              %s807 = sdiv.u32.pop %s723, 26
              %s808 = srem.u32.pop %s723, 26
              %s809 = smul.u32 %s807, 26
              %s810 = smul.u32 8, %s809
              %s811 = scalar_lea.vmem %s716, %s810 [#allocation2]
              %s812 = smul.u32 8, %s809
              %s813 = scalar_lea.vmem %s727, %s812
              // While loop
              $region64: #{breakdown_conv2d_block.1} parent=55 // loop_pre_header
                _
              $region65: #{breakdown_conv2d_block.1} parent=55 // loop_header
                %s815 = sphi 0, %s817
                %p816 = scmp.ge.s32.totalorder %s815, %s808
                %s820 = sphi 0, %s827
                %s821 = sphi %s811, %s830
                %s822 = sphi %s813, %s831
              $region66: #{breakdown_conv2d_block.1} parent=55 // loop_header_branch
                %819 = sbr.rel (%p816) target = $region70
              $region67: #{breakdown_conv2d_block.1} parent=55 // loop_body
                %v823 = vld [vmem:[%s821] sm:%s736]
                %824 = vst [vmem:[%s822] sm:%s736] %v823
                %s825 = sadd.s32 1, %s820
                %p826 = scmp.ge.s32.totalorder %s825, %s808
                %s827 = scalar_select %p826, 0, %s825
                %s828 = smul.u32 %s827, 8
                %s829 = smul.u32 %s827, 8
                %s830 = scalar_lea.vmem %s811, %s828 [#allocation2]
                %s831 = scalar_lea.vmem %s813, %s829
              $region68: #{breakdown_conv2d_block.1} parent=55 // loop_footer
                %s817 = sadd.s32 %s815, 1
              $region69: #{breakdown_conv2d_block.1} parent=55 // loop_footer_branch
                %814 = sbr.rel target = $region65
              $region70: #{breakdown_conv2d_block.1} parent=55 // loop_exit
                _
            $region56: #{breakdown_conv2d_block.1} parent=47 // pred_fallthru
              _
          $region48: #{breakdown_conv2d_block.1} parent=43 // pred_fallthru
            _
          %931 = vnop
        $region44: #{breakdown_conv2d_block.1} parent=39 // pred_fallthru
          _
      $region40: #{breakdown_conv2d_block.1} parent=5 // pred_fallthru
        _
      %p932 = scmp.le.s32.totalorder 2, %s11
      // Predicated region
      $region93: #{breakdown_conv2d_block.1} parent=5 // pred_check
        %p933 = pneg %p932
      $region94: #{breakdown_conv2d_block.1} parent=5 // pred_check_branch
        %935 = sbr.rel (%p933) target = $region96
      $region95: #{breakdown_conv2d_block.1} parent=5 // pred_region
        %s936 = ssub.s32 %s11, 2
        // Predicated region
        $region97: #{breakdown_conv2d_block.1} parent=95 // pred_check
          %p937 = pneg %p150
        $region98: #{breakdown_conv2d_block.1} parent=95 // pred_check_branch
          %939 = sbr.rel (%p937) target = $region100
        $region99: #{breakdown_conv2d_block.1} parent=95 // pred_region
          %s940 = sand.u32 %s135, 1
          %s941 = sand.u32 %s135, 1
          %s942 = smul.addr %s941, 208
          %s943 = scalar_lea.vmem [#allocation2], %s942
        $region100: #{breakdown_conv2d_block.1} parent=95 // pred_fallthru
          _
      $region96: #{breakdown_conv2d_block.1} parent=5 // pred_fallthru
        _
    $region6: #{breakdown_conv2d_block.1} parent=1 // loop_footer
      %s15 = sadd.s32 1, %s11
    $region7: #{breakdown_conv2d_block.1} parent=1 // loop_footer_branch
      %10 = sbr.rel target = $region3
    $region8: #{breakdown_conv2d_block.1} parent=1 // loop_exit
      _

</llo_original>
